<compile_context>
chip_gen: v7x
topology: tpu7x:2x2x1
jax: 0.10.0
libtpu: 0.0.40
codegen_flags: <defaults>
</compile_context>

<pallas_src>
import jax
import jax.numpy as jnp
from jax.experimental import pallas as pl
from jax.experimental.pallas import tpu as pltpu

D_MODEL = 32      # d_model
VOCAB = 16        # num_embeddings for the nn.Embedding prefix
IMG_FEAT = 64     # in_features for the nn.Linear prefix
BATCH = 2
LN_EPS = 1e-5     # PyTorch nn.LayerNorm default

# Row layout of the packed parameter slab (built once in prepare_packed_params).
_ROW_TABLE = 0                       # rows [0, VOCAB)        : embedding table (V, D)
_ROW_W = VOCAB                       # rows [VOCAB, VOCAB+F)  : linear weight (F, D)
_ROW_BIAS = VOCAB + IMG_FEAT         # row  80                : linear bias
_ROW_AR_GAMMA = _ROW_BIAS + 1        # row  81
_ROW_AR_BETA = _ROW_BIAS + 2         # row  82
_ROW_BG_GAMMA = _ROW_BIAS + 3        # row  83
_ROW_BG_BETA = _ROW_BIAS + 4         # row  84
_SLAB_ROWS = _ROW_BIAS + 5           # 85


def canvas_context_kernel(idx_ref, x_ref, slab_ref, out_ref):
    """Fused forward for both flagged canvas prefixes (single launch, no grid).

    idx_ref  : (B,)            int32, SMEM -- canvas_aspect_ratio indices
    x_ref    : (B, F)          f32,   VMEM -- squeezed canvas_bg_img_emb
    slab_ref : (_SLAB_ROWS, D) f32,   VMEM -- packed [table; W; bias; gammas; betas]
    out_ref  : (2, B, D)       f32,   VMEM -- [0]=aspect-ratio feat, [1]=bg-img feat
    """
    b_sz = x_ref.shape[0]
    d = out_ref.shape[-1]
    inv_d = 1.0 / d

    def ln_relu(y, gamma_row, beta_row):
        # Two-pass LayerNorm (PyTorch-style variance) + ReLU. Dropout == identity
        # at inference.
        mean = jnp.sum(y, axis=-1, keepdims=True) * inv_d
        centered = y - mean
        var = jnp.sum(centered * centered, axis=-1, keepdims=True) * inv_d
        yn = centered * jax.lax.rsqrt(var + LN_EPS)
        return jnp.maximum(yn * gamma_row + beta_row, 0.0)

    # ---- prefix "canvas_aspect_ratio": nn.Embedding gather -------------------
    # Two SMEM-scalar-driven dynamic row loads (no one-hot / no MXU gather).
    # NB: out-of-range / negative ids read some other slab row instead of raising
    # like nn.Embedding would.
    emb = jnp.concatenate(
        [slab_ref[pl.ds(idx_ref[b], 1), :] for b in range(b_sz)], axis=0
    )                                                                # (B, D)

    # ---- prefix "canvas_bg_img_emb": nn.Linear --------------------------------
    w = slab_ref[pl.ds(_ROW_W, IMG_FEAT), :]                        # (F, D)
    bias = slab_ref[pl.ds(_ROW_BIAS, 1), :]                         # (1, D)
    lin = jnp.dot(x_ref[...], w, preferred_element_type=jnp.float32) + bias  # (B, D)

    # ---- LayerNorm -> ReLU, one tiny store per prefix -------------------------
    out_ref[0] = ln_relu(emb,
                         slab_ref[pl.ds(_ROW_AR_GAMMA, 1), :],
                         slab_ref[pl.ds(_ROW_AR_BETA, 1), :])
    out_ref[1] = ln_relu(lin,
                         slab_ref[pl.ds(_ROW_BG_GAMMA, 1), :],
                         slab_ref[pl.ds(_ROW_BG_BETA, 1), :])


def prepare_packed_params(params):
    """Hoisted parameter prep: build the single packed VMEM slab ONCE (not per call)."""
    d = D_MODEL
    f32 = lambda a: jnp.asarray(a, jnp.float32)
    slab = jnp.concatenate(
        [
            f32(params["ar_table"]),                    # (V, D) embedding table
            f32(params["bg_w"]),                        # (F, D) linear weight (x @ W)
            f32(params["bg_b"]).reshape(1, d),          # linear bias
            f32(params["ar_gamma"]).reshape(1, d),
            f32(params["ar_beta"]).reshape(1, d),
            f32(params["bg_gamma"]).reshape(1, d),
            f32(params["bg_beta"]).reshape(1, d),
        ],
        axis=0,
    )
    assert slab.shape == (_SLAB_ROWS, d)
    return slab


@jax.jit
def embedding_canvas_context_forward(model_inputs, packed_slab):
    """Mirrors EmbeddingCanvasContext.forward: list of per-flagged-prefix features."""
    idx = model_inputs["canvas_aspect_ratio"].astype(jnp.int32)               # (B,)
    img = model_inputs["canvas_bg_img_emb"]
    # matches the .view(shape[0], shape[1]) squeeze in canvas_bg_img_emb_layer
    x2d = img.reshape(img.shape[0], img.shape[1]).astype(jnp.float32)         # (B, F)
    b = x2d.shape[0]

    out = pl.pallas_call(
        canvas_context_kernel,
        out_shape=jax.ShapeDtypeStruct((2, b, D_MODEL), jnp.float32),
        in_specs=[
            pl.BlockSpec(memory_space=pltpu.MemorySpace.SMEM),   # indices (scalar path)
            pl.BlockSpec(memory_space=pltpu.MemorySpace.VMEM),   # x
            pl.BlockSpec(memory_space=pltpu.MemorySpace.VMEM),   # packed param slab
        ],
        out_specs=pl.BlockSpec(memory_space=pltpu.MemorySpace.VMEM),
    )(idx, x2d, packed_slab)

    # feats in prefix_list order: ["canvas_aspect_ratio", "canvas_bg_img_emb"]
    return [out[0], out[1]]
    # TODO(synk): the "canvas_bg_img" prefix uses get_feat (frozen ResNet imgencoder
    # built by specific_build); a full CNN backbone is out of scope and not synthesized.


def _reference_forward(model_inputs, params):
    def ln_relu(x, g, b):
        m = jnp.mean(x, axis=-1, keepdims=True)
        v = jnp.mean((x - m) ** 2, axis=-1, keepdims=True)
        return jnp.maximum((x - m) / jnp.sqrt(v + LN_EPS) * g + b, 0.0)

    f0 = ln_relu(params["ar_table"][model_inputs["canvas_aspect_ratio"]],
                 params["ar_gamma"], params["ar_beta"])
    x = model_inputs["canvas_bg_img_emb"].reshape(BATCH, IMG_FEAT)
    f1 = ln_relu(x @ params["bg_w"] + params["bg_b"],
                 params["bg_gamma"], params["bg_beta"])
    return [f0, f1]


if __name__ == "__main__":
    key = jax.random.PRNGKey(0)
    (k_tab, k_w, k_b, k_g0, k_be0, k_g1, k_be1, k_idx, k_img) = jax.random.split(key, 9)

    # deterministic synthetic parameters (shapes follow the module __init__)
    params = {
        # nn.Embedding(VOCAB, D_MODEL) + LayerNorm(D_MODEL)
        "ar_table": jax.random.normal(k_tab, (VOCAB, D_MODEL), jnp.float32),
        "ar_gamma": 1.0 + 0.1 * jax.random.normal(k_g0, (D_MODEL,), jnp.float32),
        "ar_beta": 0.1 * jax.random.normal(k_be0, (D_MODEL,), jnp.float32),
        # nn.Linear(IMG_FEAT, D_MODEL) stored transposed + LayerNorm(D_MODEL)
        "bg_w": jax.random.normal(k_w, (IMG_FEAT, D_MODEL), jnp.float32) * 0.1,
        "bg_b": jax.random.normal(k_b, (D_MODEL,), jnp.float32) * 0.1,
        "bg_gamma": 1.0 + 0.1 * jax.random.normal(k_g1, (D_MODEL,), jnp.float32),
        "bg_beta": 0.1 * jax.random.normal(k_be1, (D_MODEL,), jnp.float32),
    }

    model_inputs = {
        "canvas_aspect_ratio": jax.random.randint(k_idx, (BATCH,), 0, VOCAB, jnp.int32),
        "canvas_bg_img_emb": jax.random.normal(k_img, (BATCH, IMG_FEAT, 1, 1), jnp.float32),
    }

    # Hoisted parameter packing (perf feedback #1): done once, outside the call path.
    packed = jax.block_until_ready(prepare_packed_params(params))

    feats = embedding_canvas_context_forward(model_inputs, packed)
    feats = [jax.block_until_ready(f) for f in feats]

    refs = _reference_forward(model_inputs, params)
    for got, ref in zip(feats, refs):
        assert got.shape == ref.shape and got.dtype == jnp.float32
        assert jnp.allclose(got, ref, atol=1e-4, rtol=1e-4), "mismatch vs reference"

    print("KERNEL_OK")
</pallas_src>

<mosaic_0001>
module attributes {stable_mosaic.version = 11 : i64} {
  func.func @canvas_context_kernel(%arg0: memref<2xi32, #tpu.memory_space<smem>>, %arg1: memref<2x64xf32, #tpu.memory_space<vmem>>, %arg2: memref<85x32xf32, #tpu.memory_space<vmem>>, %arg3: memref<2x2x32xf32, #tpu.memory_space<vmem>>) attributes {dimension_semantics = [], scalar_prefetch = 0 : i64, scratch_operands = 0 : i64, tpu.core_type = #tpu.core_type<tc>} {
    %c0 = arith.constant 0 : index
    %0 = memref.load %arg0[%c0] : memref<2xi32, #tpu.memory_space<smem>>
    %1 = arith.index_cast %0 : i32 to index
    %c0_0 = arith.constant 0 : index
    %2 = vector.load %arg2[%1, %c0_0] : memref<85x32xf32, #tpu.memory_space<vmem>>, vector<1x32xf32>
    %c1 = arith.constant 1 : index
    %3 = memref.load %arg0[%c1] : memref<2xi32, #tpu.memory_space<smem>>
    %4 = arith.index_cast %3 : i32 to index
    %c0_1 = arith.constant 0 : index
    %5 = vector.load %arg2[%4, %c0_1] : memref<85x32xf32, #tpu.memory_space<vmem>>, vector<1x32xf32>
    %6 = tpu.concatenate %2, %5 in 0 : vector<1x32xf32>, vector<1x32xf32> -> vector<2x32xf32>
    %c16 = arith.constant 16 : index
    %c0_2 = arith.constant 0 : index
    %7 = vector.load %arg2[%c16, %c0_2] : memref<85x32xf32, #tpu.memory_space<vmem>>, vector<64x32xf32>
    %c80 = arith.constant 80 : index
    %c0_3 = arith.constant 0 : index
    %8 = vector.load %arg2[%c80, %c0_3] : memref<85x32xf32, #tpu.memory_space<vmem>>, vector<1x32xf32>
    %c0_4 = arith.constant 0 : index
    %c0_5 = arith.constant 0 : index
    %9 = vector.load %arg1[%c0_4, %c0_5] : memref<2x64xf32, #tpu.memory_space<vmem>>, vector<2x64xf32>
    %cst = arith.constant dense<0.000000e+00> : vector<2x32xf32>
    %10 = tpu.matmul %9, %7, %cst {dimension_numbers = #tpu.dot_dimension_numbers<[1], [0], [0], [1], [0, 0, 1, 1], [], []>} : vector<2x64xf32>, vector<64x32xf32>, vector<2x32xf32> -> vector<2x32xf32>
    %11 = vector.broadcast %8 : vector<1x32xf32> to vector<2x32xf32>
    %12 = arith.addf %10, %11 : vector<2x32xf32>
    %c81 = arith.constant 81 : index
    %c0_6 = arith.constant 0 : index
    %13 = vector.load %arg2[%c81, %c0_6] : memref<85x32xf32, #tpu.memory_space<vmem>>, vector<1x32xf32>
    %c82 = arith.constant 82 : index
    %c0_7 = arith.constant 0 : index
    %14 = vector.load %arg2[%c82, %c0_7] : memref<85x32xf32, #tpu.memory_space<vmem>>, vector<1x32xf32>
    %cst_8 = arith.constant dense<0.000000e+00> : vector<2xf32>
    %15 = vector.multi_reduction <add>, %6, %cst_8 [1] : vector<2x32xf32> to vector<2xf32>
    %16 = vector.shape_cast %15 : vector<2xf32> to vector<2x1xf32>
    %cst_9 = arith.constant 3.125000e-02 : f32
    %17 = vector.broadcast %cst_9 : f32 to vector<2x1xf32>
    %18 = arith.mulf %16, %17 : vector<2x1xf32>
    %19 = vector.broadcast %18 : vector<2x1xf32> to vector<2x32xf32>
    %20 = arith.subf %6, %19 : vector<2x32xf32>
    %21 = arith.mulf %20, %20 : vector<2x32xf32>
    %cst_10 = arith.constant dense<0.000000e+00> : vector<2xf32>
    %22 = vector.multi_reduction <add>, %21, %cst_10 [1] : vector<2x32xf32> to vector<2xf32>
    %23 = vector.shape_cast %22 : vector<2xf32> to vector<2x1xf32>
    %cst_11 = arith.constant 3.125000e-02 : f32
    %24 = vector.broadcast %cst_11 : f32 to vector<2x1xf32>
    %25 = arith.mulf %23, %24 : vector<2x1xf32>
    %cst_12 = arith.constant 9.99999974E-6 : f32
    %26 = vector.broadcast %cst_12 : f32 to vector<2x1xf32>
    %27 = arith.addf %25, %26 : vector<2x1xf32>
    %28 = math.rsqrt %27 : vector<2x1xf32>
    %29 = vector.broadcast %28 : vector<2x1xf32> to vector<2x32xf32>
    %30 = arith.mulf %20, %29 : vector<2x32xf32>
    %31 = vector.broadcast %13 : vector<1x32xf32> to vector<2x32xf32>
    %32 = arith.mulf %30, %31 : vector<2x32xf32>
    %33 = vector.broadcast %14 : vector<1x32xf32> to vector<2x32xf32>
    %34 = arith.addf %32, %33 : vector<2x32xf32>
    %cst_13 = arith.constant 0.000000e+00 : f32
    %35 = vector.broadcast %cst_13 : f32 to vector<2x32xf32>
    %36 = arith.maximumf %34, %35 : vector<2x32xf32>
    %c0_14 = arith.constant 0 : index
    %c0_15 = arith.constant 0 : index
    %c0_16 = arith.constant 0 : index
    %37 = vector.load %arg3[%c0_14, %c0_15, %c0_16] : memref<2x2x32xf32, #tpu.memory_space<vmem>>, vector<1x2x32xf32>
    %38 = vector.shape_cast %37 : vector<1x2x32xf32> to vector<2x32xf32>
    %39 = vector.shape_cast %36 : vector<2x32xf32> to vector<1x2x32xf32>
    tpu.vector_store %arg3[%c0_14, %c0_15, %c0_16], %39 {strides = array<i32>} : memref<2x2x32xf32, #tpu.memory_space<vmem>>, vector<1x2x32xf32>,
    %c83 = arith.constant 83 : index
    %c0_17 = arith.constant 0 : index
    %40 = vector.load %arg2[%c83, %c0_17] : memref<85x32xf32, #tpu.memory_space<vmem>>, vector<1x32xf32>
    %c84 = arith.constant 84 : index
    %c0_18 = arith.constant 0 : index
    %41 = vector.load %arg2[%c84, %c0_18] : memref<85x32xf32, #tpu.memory_space<vmem>>, vector<1x32xf32>
    %cst_19 = arith.constant dense<0.000000e+00> : vector<2xf32>
    %42 = vector.multi_reduction <add>, %12, %cst_19 [1] : vector<2x32xf32> to vector<2xf32>
    %43 = vector.shape_cast %42 : vector<2xf32> to vector<2x1xf32>
    %cst_20 = arith.constant 3.125000e-02 : f32
    %44 = vector.broadcast %cst_20 : f32 to vector<2x1xf32>
    %45 = arith.mulf %43, %44 : vector<2x1xf32>
    %46 = vector.broadcast %45 : vector<2x1xf32> to vector<2x32xf32>
    %47 = arith.subf %12, %46 : vector<2x32xf32>
    %48 = arith.mulf %47, %47 : vector<2x32xf32>
    %cst_21 = arith.constant dense<0.000000e+00> : vector<2xf32>
    %49 = vector.multi_reduction <add>, %48, %cst_21 [1] : vector<2x32xf32> to vector<2xf32>
    %50 = vector.shape_cast %49 : vector<2xf32> to vector<2x1xf32>
    %cst_22 = arith.constant 3.125000e-02 : f32
    %51 = vector.broadcast %cst_22 : f32 to vector<2x1xf32>
    %52 = arith.mulf %50, %51 : vector<2x1xf32>
    %cst_23 = arith.constant 9.99999974E-6 : f32
    %53 = vector.broadcast %cst_23 : f32 to vector<2x1xf32>
    %54 = arith.addf %52, %53 : vector<2x1xf32>
    %55 = math.rsqrt %54 : vector<2x1xf32>
    %56 = vector.broadcast %55 : vector<2x1xf32> to vector<2x32xf32>
    %57 = arith.mulf %47, %56 : vector<2x32xf32>
    %58 = vector.broadcast %40 : vector<1x32xf32> to vector<2x32xf32>
    %59 = arith.mulf %57, %58 : vector<2x32xf32>
    %60 = vector.broadcast %41 : vector<1x32xf32> to vector<2x32xf32>
    %61 = arith.addf %59, %60 : vector<2x32xf32>
    %cst_24 = arith.constant 0.000000e+00 : f32
    %62 = vector.broadcast %cst_24 : f32 to vector<2x32xf32>
    %63 = arith.maximumf %61, %62 : vector<2x32xf32>
    %c1_25 = arith.constant 1 : index
    %c0_26 = arith.constant 0 : index
    %c0_27 = arith.constant 0 : index
    %64 = vector.load %arg3[%c1_25, %c0_26, %c0_27] : memref<2x2x32xf32, #tpu.memory_space<vmem>>, vector<1x2x32xf32>
    %65 = vector.shape_cast %64 : vector<1x2x32xf32> to vector<2x32xf32>
    %66 = vector.shape_cast %63 : vector<2x32xf32> to vector<1x2x32xf32>
    tpu.vector_store %arg3[%c1_25, %c0_26, %c0_27], %66 {strides = array<i32>} : memref<2x2x32xf32, #tpu.memory_space<vmem>>, vector<1x2x32xf32>,
    return
  }
}

</mosaic_0001>

<llo_original>
// kernel: embedding_canvas_context_forward.1
$region0: #{embedding_canvas_context_forward.1}
  #allocation0 [shape = 'u32[]', space=smem, size = 0x4, offset = 0x4, fixed_abs, tag = 'smem constant byte address 0x4 - core index']
  #allocation1 [shape = 'u32[144,128]{1,0:T(1,128)}', space=vmem, size = 0x12000, scoped, tag = 'internal scratch']
  %s0 = inlined_call_operand.vmem [shape: s32[2], index: 0, kind: input, shape index: {}]
  %s1 = inlined_call_operand.vmem [shape: f32[2,64], index: 1, kind: input, shape index: {}]
  %s2 = inlined_call_operand.vmem [shape: f32[85,32], index: 2, kind: input, shape index: {}]
  %s3 = inlined_call_operand.vmem [shape: f32[2,2,32], index: 3, kind: output, shape index: {}]
  %s4 = sld [smem:[#allocation0]]
  $region26: #{embedding_canvas_context_forward.1} parent=0
    _
  %s6 = ssub.s32 1, %s4
  %s7 = scalar_select 0, %s6, %s4
  $region1: #{embedding_canvas_context_forward.1} parent=0
    #allocation2 [shape = 'u8[512]{0}', space=smem, size = 0x200, scoped, tag = 'input window, operand 0, single buffered']
    #allocation3 [shape = 's32[1]{0}', space=sflag, size = 0x4, scoped, tag = 'scoped memory for embedding_canvas_context_forward.1']
    %8 = vsyncpa [#allocation3], 0
    // Predicated region
    $region2: #{embedding_canvas_context_forward.1} parent=1 // pred_check
      _
    $region3: #{embedding_canvas_context_forward.1} parent=1 // pred_check_branch
      %10 = sbr.rel (0) target = $region5
    $region4: #{embedding_canvas_context_forward.1} parent=1 // pred_region
      %s12 = ssub.s32 16, 16
      %13 = vsyncadd [#allocation3], %s12
      %s15 = sshll.u32 %s0, 4
      %s16 = int_to_ptr.vmem [resolvable:$true] %s15
      %18 = dma.vmem_to_smem %s16, 16, [#allocation2], [#allocation3]
    $region5: #{embedding_canvas_context_forward.1} parent=1 // pred_fallthru
      _
    // Predicated region
    $region6: #{embedding_canvas_context_forward.1} parent=1 // pred_check
      _
    $region7: #{embedding_canvas_context_forward.1} parent=1 // pred_check_branch
      %20 = sbr.rel (0) target = $region9
    $region8: #{embedding_canvas_context_forward.1} parent=1 // pred_region
      _
    $region9: #{embedding_canvas_context_forward.1} parent=1 // pred_fallthru
      _
    // Predicated region
    $region10: #{embedding_canvas_context_forward.1} parent=1 // pred_check
      _
    $region11: #{embedding_canvas_context_forward.1} parent=1 // pred_check_branch
      %22 = sbr.rel (0) target = $region13
    $region12: #{embedding_canvas_context_forward.1} parent=1 // pred_region
      _
    $region13: #{embedding_canvas_context_forward.1} parent=1 // pred_fallthru
      _
    // Predicated region
    $region14: #{embedding_canvas_context_forward.1} parent=1 // pred_check
      _
    $region15: #{embedding_canvas_context_forward.1} parent=1 // pred_check_branch
      %24 = sbr.rel (0) target = $region17
    $region16: #{embedding_canvas_context_forward.1} parent=1 // pred_region
      %25 = dma.done [#allocation3], 16
    $region17: #{embedding_canvas_context_forward.1} parent=1 // pred_fallthru
      _
    %26 = sfence
    %s27 = sld [smem:[#allocation2]]
    %s28 = scalar_lea.vmem %s2, %s27
    %v29 = vld [vmem:[%s28] sm:$0x1]
    %s30 = sld [smem:[#allocation2 + $0x1]]
    %s31 = scalar_lea.vmem %s2, %s30
    %v32 = vld [vmem:[%s31] sm:$0x1]
    %v34 = vrot.slane %v32, 7
    %vm36 = vcmask 1040384
    %v37 = vsel %vm36, %v29, %v34
    %v38 = vld [vmem:[%s2 + $0x10] sm:$0xff]
    %v39 = vld [vmem:[%s2 + $0x18] sm:$0xff]
    %v40 = vld [vmem:[%s2 + $0x20] sm:$0xff]
    %v41 = vld [vmem:[%s2 + $0x28] sm:$0xff]
    %v42 = vld [vmem:[%s2 + $0x30] sm:$0xff]
    %v43 = vld [vmem:[%s2 + $0x38] sm:$0xff]
    %v44 = vld [vmem:[%s2 + $0x40] sm:$0xff]
    %v45 = vld [vmem:[%s2 + $0x48] sm:$0xff]
    %v46 = vld [vmem:[%s2 + $0x50] sm:$0x1]
    %v47 = vld [vmem:[%s1] sm:$0x3]
    %v48 = vlaneseq
    %v49 = vshrl.u32 %v48, 7
    %v50 = vsub.s32 0, %v49
    %v51 = vrot.slane %v46, %v50
    %vm52 = vcmask 523264
    %v54 = vsel %vm52, %v47, 0
    %56 = vmatprep.subr.mxu0 0.0
    %57 = vmatpush1.msra.mxu0 %v38
    %58 = vmatprep.subr.mxu0 0.0
    %59 = vmatpush1.msra.mxu0 %v39
    %60 = vmatprep.subr.mxu0 0.0
    %61 = vmatpush1.msra.mxu0 %v40
    %62 = vmatprep.subr.mxu0 0.0
    %63 = vmatpush1.msra.mxu0 %v41
    %64 = vmatprep.subr.mxu0 0.0
    %65 = vmatpush1.msra.mxu0 %v42
    %66 = vmatprep.subr.mxu0 0.0
    %67 = vmatpush1.msra.mxu0 %v43
    %68 = vmatprep.subr.mxu0 0.0
    %69 = vmatpush1.msra.mxu0 %v44
    %70 = vmatprep.subr.mxu0 0.0
    %71 = vmatpush1.msra.mxu0 %v45
    %72 = vmatprep.subr.mxu0 0.0
    %73 = vmatpush1.msra.mxu0 0.0
    %74 = vmatprep.subr.mxu0 0.0
    %75 = vmatpush1.msra.mxu0 0.0
    %76 = vmatprep.subr.mxu0 0.0
    %77 = vmatpush1.msra.mxu0 0.0
    %78 = vmatprep.subr.mxu0 0.0
    %79 = vmatpush1.msra.mxu0 0.0
    %80 = vmatprep.subr.mxu0 0.0
    %81 = vmatpush1.msra.mxu0 0.0
    %82 = vmatprep.subr.mxu0 0.0
    %83 = vmatpush1.msra.mxu0 0.0
    %84 = vmatprep.subr.mxu0 0.0
    %85 = vmatpush1.msra.mxu0 0.0
    %86 = vmatprep.subr.mxu0 0.0
    %87 = vmatpush1.msra.mxu0 0.0
    %88 = vmatprep.subr.mxu0 0.0
    %89 = vmatpush1.msra.mxu0 0.0
    %90 = vmatprep.subr.mxu0 0.0
    %91 = vmatpush1.msra.mxu0 0.0
    %92 = vmatprep.subr.mxu0 0.0
    %93 = vmatpush1.msra.mxu0 0.0
    %94 = vmatprep.subr.mxu0 0.0
    %95 = vmatpush1.msra.mxu0 0.0
    %96 = vmatprep.subr.mxu0 0.0
    %97 = vmatpush1.msra.mxu0 0.0
    %98 = vmatprep.subr.mxu0 0.0
    %99 = vmatpush1.msra.mxu0 0.0
    %100 = vmatprep.subr.mxu0 0.0
    %101 = vmatpush1.msra.mxu0 0.0
    %102 = vmatprep.subr.mxu0 0.0
    %103 = vmatpush1.msra.mxu0 0.0
    %104 = vmatprep.subr.mxu0 0.0
    %105 = vmatpush1.msra.mxu0 0.0
    %106 = vmatprep.subr.mxu0 0.0
    %107 = vmatpush1.msra.mxu0 0.0
    %108 = vmatprep.subr.mxu0 0.0
    %109 = vmatpush1.msra.mxu0 0.0
    %110 = vmatprep.subr.mxu0 0.0
    %111 = vmatpush1.msra.mxu0 0.0
    %112 = vmatprep.subr.mxu0 0.0
    %113 = vmatpush1.msra.mxu0 0.0
    %114 = vmatprep.subr.mxu0 0.0
    %115 = vmatpush1.msra.mxu0 0.0
    %116 = vmatprep.subr.mxu0 0.0
    %117 = vmatpush1.msra.mxu0 0.0
    %118 = vmatprep.subr.mxu0 0.0
    %119 = vmatpush1.msra.mxu0 0.0
    %120 = vmatprep.mubr.f32.mxu0 0.0
    %121 = vmatmul.mubr.f32.gmra.mrb[0].mxu0 %v54
    %v122 = vpop.f32.mrb[0].mxu0
    %v123 = vadd.f32 %v51, %v122
    %v124 = vpop.f32.mrb[0].mxu0
    %125 = vdwg.mxu0
    %v126 = vld [vmem:[%s2 + $0x51] sm:$0x1]
    %v127 = vld [vmem:[%s2 + $0x52] sm:$0x1]
    %vm128 = vcmask 254976
    %v129 = vsel %vm128, %v37, 0.0
    %130 = vadd.xlane.f32.xlu0 %v129
    %v131 = vpop.xlane.xlu0 %130
    %v132 = vmul.f32 %v131, 0.03125
    %v133 = vsub.f32 %v37, %v132
    %v134 = vmul.f32 %v133, %v133
    %v135 = vsel %vm128, %v134, 0.0
    %136 = vadd.xlane.f32.xlu0 %v135
    %v137 = vpop.xlane.xlu0 %136
    %v138 = vmul.f32 %v137, 0.03125
    %v139 = vadd.f32 %v138, 1e-05
    %v140 = vrsqrt.pop %v139
    %v141 = vmul.f32 %v133, %v140
    %v142 = vlaneseq
    %v143 = vshrl.u32 %v142, 7
    %v144 = vsub.s32 0, %v143
    %v145 = vrot.slane %v126, %v144
    %v146 = vmul.f32 %v141, %v145
    %v147 = vlaneseq
    %v148 = vshrl.u32 %v147, 7
    %v149 = vsub.s32 0, %v148
    %v150 = vrot.slane %v127, %v149
    %v151 = vadd.f32 %v146, %v150
    %v152 = vmax.f32 %v151, 0.0
    %153 = vst.msk [vmem:[%s3] sm:$0x3] %vm128, %v152
    %v154 = vld [vmem:[%s2 + $0x53] sm:$0x1]
    %v155 = vld [vmem:[%s2 + $0x54] sm:$0x1]
    %v156 = vsel %vm128, %v123, 0.0
    %157 = vadd.xlane.f32.xlu0 %v156
    %v158 = vpop.xlane.xlu0 %157
    %v159 = vmul.f32 %v158, 0.03125
    %v160 = vsub.f32 %v123, %v159
    %v161 = vmul.f32 %v160, %v160
    %v162 = vsel %vm128, %v161, 0.0
    %163 = vadd.xlane.f32.xlu0 %v162
    %v164 = vpop.xlane.xlu0 %163
    %v165 = vmul.f32 %v164, 0.03125
    %v166 = vadd.f32 %v165, 1e-05
    %v167 = vrsqrt.pop %v166
    %v168 = vmul.f32 %v160, %v167
    %v169 = vlaneseq
    %v170 = vshrl.u32 %v169, 7
    %v171 = vsub.s32 0, %v170
    %v172 = vrot.slane %v154, %v171
    %v173 = vmul.f32 %v168, %v172
    %v174 = vlaneseq
    %v175 = vshrl.u32 %v174, 7
    %v176 = vsub.s32 0, %v175
    %v177 = vrot.slane %v155, %v176
    %v178 = vadd.f32 %v173, %v177
    %v179 = vmax.f32 %v178, 0.0
    %s180 = scalar_lea.vmem %s3, 2
    %181 = vst.msk [vmem:[%s180] sm:$0x3] %vm128, %v179
    // Predicated region
    $region18: #{embedding_canvas_context_forward.1} parent=1 // pred_check
      _
    $region19: #{embedding_canvas_context_forward.1} parent=1 // pred_check_branch
      %183 = sbr.rel (0) target = $region21
    $region20: #{embedding_canvas_context_forward.1} parent=1 // pred_region
      _
    $region21: #{embedding_canvas_context_forward.1} parent=1 // pred_fallthru
      _
    // Predicated region
    $region22: #{embedding_canvas_context_forward.1} parent=1 // pred_check
      _
    $region23: #{embedding_canvas_context_forward.1} parent=1 // pred_check_branch
      %185 = sbr.rel (0) target = $region25
    $region24: #{embedding_canvas_context_forward.1} parent=1 // pred_region
      _
    $region25: #{embedding_canvas_context_forward.1} parent=1 // pred_fallthru
      _
    %186 = vsyncpa [#allocation3], 1

</llo_original>
